<compile_context>
chip_gen: v7x
topology: tpu7x:2x2x1
jax: 0.10.0
libtpu: 0.0.40
codegen_flags: <defaults>
</compile_context>

<pallas_src>
import functools
import math

import jax
import jax.numpy as jnp
from jax import lax
from jax.experimental import pallas as pl
from jax.experimental.pallas import tpu as pltpu


def _gelu_exact(x):
    # PyTorch nn.GELU default = exact erf formulation (kept for parity).
    return 0.5 * x * (1.0 + lax.erf(x * (1.0 / math.sqrt(2.0))))


# ----------------------------------------------------------------------------
# Fast path: hidden fits one chunk -> single fused pass, no scratch.
# ----------------------------------------------------------------------------
def _ffn_kernel_fused(x_ref, w1_ref, b1_ref, w2_ref, b2_ref, o_ref):
    # x_ref : (TM, dim)   w1_ref: (dim, H)   b1_ref: (1, H)
    # w2_ref: (H, dim)    b2_ref: (1, dim)   o_ref : (TM, dim)
    h = jnp.dot(x_ref[...], w1_ref[...], preferred_element_type=jnp.float32)
    h = h + b1_ref[...].astype(jnp.float32)
    h = _gelu_exact(h)
    # Dropout(p=0.0) -> identity
    out = jnp.dot(h.astype(w2_ref.dtype), w2_ref[...],
                  preferred_element_type=jnp.float32)
    out = out + b2_ref[...].astype(jnp.float32)
    # Dropout(p=0.0) -> identity
    o_ref[...] = out.astype(o_ref.dtype)


# ----------------------------------------------------------------------------
# Chunked path: stream the hidden dimension, accumulate in f32 VMEM scratch.
# ----------------------------------------------------------------------------
def _ffn_kernel_chunked(x_ref, w1_ref, b1_ref, w2_ref, b2_ref, o_ref, acc_ref):
    # x_ref : (TM, dim)      row tile (constant across hidden axis -> no re-DMA)
    # w1_ref: (dim, TH)      hidden chunk of W1
    # b1_ref: (1, TH)        hidden chunk of b1
    # w2_ref: (TH, dim)      hidden chunk of W2
    # b2_ref: (1, dim)       full (resident)
    # o_ref : (TM, dim)      written on last hidden chunk
    # acc_ref: (TM, dim) f32 VMEM accumulator
    j = pl.program_id(1)

    @pl.when(j == 0)
    def _init():
        # Fold the second bias into the accumulator init (hoisted broadcast).
        acc_ref[...] = jnp.broadcast_to(
            b2_ref[...].astype(jnp.float32), acc_ref.shape)

    h = jnp.dot(x_ref[...], w1_ref[...], preferred_element_type=jnp.float32)
    h = h + b1_ref[...].astype(jnp.float32)
    h = _gelu_exact(h)
    # Dropout(p=0.0) -> identity

    acc_ref[...] += jnp.dot(h.astype(w2_ref.dtype), w2_ref[...],
                            preferred_element_type=jnp.float32)
    # Dropout(p=0.0) -> identity

    @pl.when(j == pl.num_programs(1) - 1)
    def _store():
        o_ref[...] = acc_ref[...].astype(o_ref.dtype)


def _pick_hidden_chunk(hidden, tile_h):
    """Largest 128-multiple chunk <= tile_h that divides hidden, else hidden."""
    if hidden <= tile_h:
        return hidden
    th = (tile_h // 128) * 128
    while th >= 128:
        if hidden % th == 0:
            return th
        th -= 128
    # Fallback: full hidden (block == full array dim is always legal).
    return hidden


@functools.partial(jax.jit, static_argnames=("tile_m", "tile_h"))
def feed_forward(x, w1, b1, w2, b2, *, tile_m=256, tile_h=512):
    """x: (B, S, dim) -> (B, S, dim). Matches PyTorch FeedForward.forward."""
    B, S, dim = x.shape
    hidden = w1.shape[1]
    M = B * S

    x2 = x.reshape(M, dim)

    # Effective row tile: large MXU-shaped tile, clamped for tiny inputs,
    # always a multiple of 8 (sublane).
    Mp8 = pl.cdiv(M, 8) * 8
    tm = min(tile_m, Mp8)
    Mp = pl.cdiv(M, tm) * tm
    if Mp != M:
        # TODO(synk): a masked/BoundedSlice ragged last tile would avoid this
        # extra HBM copy; only hit when M is not a multiple of the row tile.
        x2 = jnp.pad(x2, ((0, Mp - M), (0, 0)))

    th = _pick_hidden_chunk(hidden, tile_h)
    n_row_tiles = Mp // tm
    n_h_chunks = hidden // th

    b1_2 = b1.reshape(1, hidden)
    b2_2 = b2.reshape(1, dim)

    # Advisory cost estimate for the XLA scheduler.
    a_item = jnp.dtype(x.dtype).itemsize
    w_item = jnp.dtype(w1.dtype).itemsize
    cost = pl.CostEstimate(
        flops=4 * Mp * dim * hidden,
        transcendentals=Mp * hidden,
        bytes_accessed=(2 * Mp * dim * a_item
                        + n_row_tiles * 2 * dim * hidden * w_item
                        + n_row_tiles * (hidden + dim) * w_item),
    )

    if n_h_chunks == 1:
        # ---- Fast path: single hidden chunk, fused, no scratch ----
        grid_spec = pltpu.PrefetchScalarGridSpec(
            num_scalar_prefetch=0,
            grid=(n_row_tiles,),
            in_specs=[
                pl.BlockSpec((tm, dim), lambda i: (i, 0)),       # x row tile
                pl.BlockSpec((dim, hidden), lambda i: (0, 0)),   # W1 (resident)
                pl.BlockSpec((1, hidden), lambda i: (0, 0)),     # b1 (resident)
                pl.BlockSpec((hidden, dim), lambda i: (0, 0)),   # W2 (resident)
                pl.BlockSpec((1, dim), lambda i: (0, 0)),        # b2 (resident)
            ],
            out_specs=pl.BlockSpec((tm, dim), lambda i: (i, 0)),
        )
        kernel = _ffn_kernel_fused
        dim_semantics = ("parallel",)
    else:
        # ---- Chunked path: hidden streamed on a trailing reduction axis ----
        grid_spec = pltpu.PrefetchScalarGridSpec(
            num_scalar_prefetch=0,
            grid=(n_row_tiles, n_h_chunks),
            in_specs=[
                pl.BlockSpec((tm, dim), lambda i, j: (i, 0)),    # x row tile
                pl.BlockSpec((dim, th), lambda i, j: (0, j)),    # W1 chunk
                pl.BlockSpec((1, th), lambda i, j: (0, j)),      # b1 chunk
                pl.BlockSpec((th, dim), lambda i, j: (j, 0)),    # W2 chunk
                pl.BlockSpec((1, dim), lambda i, j: (0, 0)),     # b2 (resident)
            ],
            out_specs=pl.BlockSpec((tm, dim), lambda i, j: (i, 0)),
            scratch_shapes=[pltpu.VMEM((tm, dim), jnp.float32)],
        )
        kernel = _ffn_kernel_chunked
        dim_semantics = ("parallel", "arbitrary")

    out = pl.pallas_call(
        kernel,
        out_shape=jax.ShapeDtypeStruct((Mp, dim), x.dtype),
        grid_spec=grid_spec,
        compiler_params=pltpu.CompilerParams(
            dimension_semantics=dim_semantics,
            vmem_limit_bytes=64 * 1024 * 1024,
        ),
        cost_estimate=cost,
    )(x2, w1, b1_2, w2, b2_2)

    if Mp != M:
        out = out[:M]
    return out.reshape(B, S, dim)


def _init_linear(key, fan_in, fan_out, dtype=jnp.float32):
    # Deterministic init mirroring nn.Linear's kaiming-uniform bounds.
    kw, kb = jax.random.split(key)
    limit_w = 1.0 / math.sqrt(fan_in)
    w = jax.random.uniform(kw, (fan_in, fan_out), dtype,
                           minval=-limit_w, maxval=limit_w)
    b = jax.random.uniform(kb, (fan_out,), dtype,
                           minval=-limit_w, maxval=limit_w)
    return w, b


if __name__ == "__main__":
    key = jax.random.PRNGKey(0)
    k_x, k_l1, k_l2, k_x2, k_l3, k_l4 = jax.random.split(key, 6)

    # --- Case 1: small shapes (fast path: single hidden chunk) ---
    B, S, dim, hidden = 2, 8, 32, 64
    x = jax.random.normal(k_x, (B, S, dim), jnp.float32)
    w1, b1 = _init_linear(k_l1, dim, hidden)    # Linear(dim -> hidden)
    w2, b2 = _init_linear(k_l2, hidden, dim)    # Linear(hidden -> dim)

    y = feed_forward(x, w1, b1, w2, b2)
    jax.block_until_ready(y)

    ref = jax.nn.gelu(x @ w1 + b1, approximate=False) @ w2 + b2
    assert y.shape == (B, S, dim)
    assert jnp.allclose(y, ref, atol=1e-5, rtol=1e-5)

    # --- Case 2: force the chunked (hidden-streamed) path ---
    dim2, hidden2 = 32, 256
    x2 = jax.random.normal(k_x2, (B, S, dim2), jnp.float32)
    w1b, b1b = _init_linear(k_l3, dim2, hidden2)
    w2b, b2b = _init_linear(k_l4, hidden2, dim2)

    y2 = feed_forward(x2, w1b, b1b, w2b, b2b, tile_h=128)
    jax.block_until_ready(y2)

    ref2 = jax.nn.gelu(x2 @ w1b + b1b, approximate=False) @ w2b + b2b
    assert y2.shape == (B, S, dim2)
    assert jnp.allclose(y2, ref2, atol=1e-5, rtol=1e-5)

    print("KERNEL_OK")
</pallas_src>

<mosaic_0001>
module attributes {stable_mosaic.version = 11 : i64} {
  func.func @_ffn_kernel_fused(%arg0: i32, %arg1: memref<16x32xf32, #tpu.memory_space<vmem>>, %arg2: memref<32x64xf32, #tpu.memory_space<vmem>>, %arg3: memref<1x64xf32, #tpu.memory_space<vmem>>, %arg4: memref<64x32xf32, #tpu.memory_space<vmem>>, %arg5: memref<1x32xf32, #tpu.memory_space<vmem>>, %arg6: memref<16x32xf32, #tpu.memory_space<vmem>>) attributes {dimension_semantics = [#tpu.dimension_semantics<parallel>], iteration_bounds = array<i64: 1>, scalar_prefetch = 0 : i64, scratch_operands = 0 : i64, tpu.core_type = #tpu.core_type<tc>, window_params = [{transform_indices = @transform_0, window_bounds = array<i64: 16, 32>}, {pipeline_mode = #tpu.pipeline_mode<synchronous>, transform_indices = @transform_1, window_bounds = array<i64: 32, 64>}, {pipeline_mode = #tpu.pipeline_mode<synchronous>, transform_indices = @transform_2, window_bounds = array<i64: 1, 64>}, {pipeline_mode = #tpu.pipeline_mode<synchronous>, transform_indices = @transform_3, window_bounds = array<i64: 64, 32>}, {pipeline_mode = #tpu.pipeline_mode<synchronous>, transform_indices = @transform_4, window_bounds = array<i64: 1, 32>}, {transform_indices = @transform_5, window_bounds = array<i64: 16, 32>}]} {
    %c0 = arith.constant 0 : index
    %c0_0 = arith.constant 0 : index
    %0 = vector.load %arg1[%c0, %c0_0] : memref<16x32xf32, #tpu.memory_space<vmem>>, vector<16x32xf32>
    %c0_1 = arith.constant 0 : index
    %c0_2 = arith.constant 0 : index
    %1 = vector.load %arg2[%c0_1, %c0_2] : memref<32x64xf32, #tpu.memory_space<vmem>>, vector<32x64xf32>
    %cst = arith.constant dense<0.000000e+00> : vector<16x64xf32>
    %2 = tpu.matmul %0, %1, %cst {dimension_numbers = #tpu.dot_dimension_numbers<[1], [0], [0], [1], [0, 0, 1, 1], [], []>} : vector<16x32xf32>, vector<32x64xf32>, vector<16x64xf32> -> vector<16x64xf32>
    %c0_3 = arith.constant 0 : index
    %c0_4 = arith.constant 0 : index
    %3 = vector.load %arg3[%c0_3, %c0_4] : memref<1x64xf32, #tpu.memory_space<vmem>>, vector<1x64xf32>
    %4 = vector.broadcast %3 : vector<1x64xf32> to vector<16x64xf32>
    %5 = arith.addf %2, %4 : vector<16x64xf32>
    %cst_5 = arith.constant 5.000000e-01 : f32
    %6 = vector.broadcast %cst_5 : f32 to vector<16x64xf32>
    %7 = arith.mulf %6, %5 : vector<16x64xf32>
    %cst_6 = arith.constant 0.707106769 : f32
    %8 = vector.broadcast %cst_6 : f32 to vector<16x64xf32>
    %9 = arith.mulf %5, %8 : vector<16x64xf32>
    %10 = math.erf %9 : vector<16x64xf32>
    %cst_7 = arith.constant 1.000000e+00 : f32
    %11 = vector.broadcast %cst_7 : f32 to vector<16x64xf32>
    %12 = arith.addf %11, %10 : vector<16x64xf32>
    %13 = arith.mulf %7, %12 : vector<16x64xf32>
    %c0_8 = arith.constant 0 : index
    %c0_9 = arith.constant 0 : index
    %14 = vector.load %arg4[%c0_8, %c0_9] : memref<64x32xf32, #tpu.memory_space<vmem>>, vector<64x32xf32>
    %cst_10 = arith.constant dense<0.000000e+00> : vector<16x32xf32>
    %15 = tpu.matmul %13, %14, %cst_10 {dimension_numbers = #tpu.dot_dimension_numbers<[1], [0], [0], [1], [0, 0, 1, 1], [], []>} : vector<16x64xf32>, vector<64x32xf32>, vector<16x32xf32> -> vector<16x32xf32>
    %c0_11 = arith.constant 0 : index
    %c0_12 = arith.constant 0 : index
    %16 = vector.load %arg5[%c0_11, %c0_12] : memref<1x32xf32, #tpu.memory_space<vmem>>, vector<1x32xf32>
    %17 = vector.broadcast %16 : vector<1x32xf32> to vector<16x32xf32>
    %18 = arith.addf %15, %17 : vector<16x32xf32>
    %c0_13 = arith.constant 0 : index
    %c0_14 = arith.constant 0 : index
    %19 = vector.load %arg6[%c0_13, %c0_14] : memref<16x32xf32, #tpu.memory_space<vmem>>, vector<16x32xf32>
    tpu.vector_store %arg6[%c0_13, %c0_14], %18 {strides = array<i32>} : memref<16x32xf32, #tpu.memory_space<vmem>>, vector<16x32xf32>,
    return
  }
  func.func @transform_0(%arg0: i32) -> (i32, i32) {
    %c0_i32 = arith.constant 0 : i32
    %c0_i32_0 = arith.constant 0 : i32
    return %arg0, %c0_i32 : i32, i32
  }
  func.func @transform_1(%arg0: i32) -> (i32, i32) {
    %c0_i32 = arith.constant 0 : i32
    %c0_i32_0 = arith.constant 0 : i32
    %c0_i32_1 = arith.constant 0 : i32
    return %c0_i32, %c0_i32_0 : i32, i32
  }
  func.func @transform_2(%arg0: i32) -> (i32, i32) {
    %c0_i32 = arith.constant 0 : i32
    %c0_i32_0 = arith.constant 0 : i32
    %c0_i32_1 = arith.constant 0 : i32
    return %c0_i32, %c0_i32_0 : i32, i32
  }
  func.func @transform_3(%arg0: i32) -> (i32, i32) {
    %c0_i32 = arith.constant 0 : i32
    %c0_i32_0 = arith.constant 0 : i32
    %c0_i32_1 = arith.constant 0 : i32
    return %c0_i32, %c0_i32_0 : i32, i32
  }
  func.func @transform_4(%arg0: i32) -> (i32, i32) {
    %c0_i32 = arith.constant 0 : i32
    %c0_i32_0 = arith.constant 0 : i32
    %c0_i32_1 = arith.constant 0 : i32
    return %c0_i32, %c0_i32_0 : i32, i32
  }
  func.func @transform_5(%arg0: i32) -> (i32, i32) {
    %c0_i32 = arith.constant 0 : i32
    %c0_i32_0 = arith.constant 0 : i32
    return %arg0, %c0_i32 : i32, i32
  }
}

</mosaic_0001>

<llo_original>
// kernel: feed_forward.1
$region0: #{feed_forward.1}
  #allocation0 [shape = 'u32[]', space=smem, size = 0x4, offset = 0x4, fixed_abs, tag = 'smem constant byte address 0x4 - core index']
  #allocation1 [shape = 'u32[144,128]{1,0:T(1,128)}', space=vmem, size = 0x12000, scoped, tag = 'internal scratch']
  %s0 = inlined_call_operand.hbm [shape: f32[16,32], index: 0, kind: input, shape index: {}]
  %s1 = inlined_call_operand.hbm [shape: f32[32,64], index: 1, kind: input, shape index: {}]
  %s2 = inlined_call_operand.hbm [shape: f32[1,64], index: 2, kind: input, shape index: {}]
  %s3 = inlined_call_operand.hbm [shape: f32[64,32], index: 3, kind: input, shape index: {}]
  %s4 = inlined_call_operand.hbm [shape: f32[1,32], index: 4, kind: input, shape index: {}]
  %s5 = inlined_call_operand.hbm [shape: f32[16,32], index: 5, kind: output, shape index: {}]
  %s6 = sld [smem:[#allocation0]]
  $region50: #{feed_forward.1} parent=0
    _
  %s8 = ssub.s32 1, %s6
  %s9 = scalar_select 0, %s8, %s6
  $region1: #{feed_forward.1} parent=0
    #allocation2 [shape = 'u8[8192]{0}', space=vmem, size = 0x2000, scoped, tag = 'input window, operand 0, single buffered']
    #allocation3 [shape = 's32[1]{0}', space=sflag, size = 0x4, scoped, tag = 'scoped memory for feed_forward.1']
    #allocation4 [shape = 's32[1]{0}', space=sflag, size = 0x4, scoped, tag = 'scoped memory for feed_forward.1']
    #allocation5 [shape = 'u8[16384]{0}', space=vmem, size = 0x4000, scoped, tag = 'input window, operand 1, single buffered']
    #allocation6 [shape = 's32[1]{0}', space=sflag, size = 0x4, scoped, tag = 'scoped memory for feed_forward.1']
    #allocation7 [shape = 'u8[512]{0}', space=vmem, size = 0x400, scoped, tag = 'input window, operand 2, single buffered']
    #allocation8 [shape = 'u8[32768]{0}', space=vmem, size = 0x8000, scoped, tag = 'input window, operand 3, single buffered']
    #allocation9 [shape = 's32[1]{0}', space=sflag, size = 0x4, scoped, tag = 'scoped memory for feed_forward.1']
    #allocation10 [shape = 'u8[512]{0}', space=vmem, size = 0x400, scoped, tag = 'input window, operand 4, single buffered']
    #allocation11 [shape = 'u8[8192]{0}', space=vmem, size = 0x2000, scoped, tag = 'output window, operand 0, single buffered']
    %10 = vsyncpa [#allocation3], 0
    %11 = vsyncpa [#allocation6], 0
    %12 = vsyncpa [#allocation9], 0
    %13 = vsyncpa [#allocation4], 0
    // Predicated region
    $region2: #{feed_forward.1} parent=1 // pred_check
      _
    $region3: #{feed_forward.1} parent=1 // pred_check_branch
      %15 = sbr.rel (0) target = $region5
    $region4: #{feed_forward.1} parent=1 // pred_region
      %s17 = ssub.s32 256, 256
      %18 = vsyncadd [#allocation3], %s17
      %s19 = sshll.u32 [#allocation2], 4
      %s20 = int_to_ptr.vmem [resolvable:$true] %s19
      %25 = dma.hbm_to_vmem [thread:$0]  %s0, 256, %s20, [#allocation3], 128, 128, 8
    $region5: #{feed_forward.1} parent=1 // pred_fallthru
      _
    // Predicated region
    $region6: #{feed_forward.1} parent=1 // pred_check
      _
    $region7: #{feed_forward.1} parent=1 // pred_check_branch
      %27 = sbr.rel (0) target = $region9
    $region8: #{feed_forward.1} parent=1 // pred_region
      %s29 = ssub.s32 512, 512
      %30 = vsyncadd [#allocation6], %s29
      %s31 = sshll.u32 [#allocation5], 4
      %s32 = int_to_ptr.vmem [resolvable:$true] %s31
      %37 = dma.hbm_to_vmem [thread:$0]  %s1, 512, %s32, [#allocation6], 128, 128, 8
    $region9: #{feed_forward.1} parent=1 // pred_fallthru
      _
    // Predicated region
    $region10: #{feed_forward.1} parent=1 // pred_check
      _
    $region11: #{feed_forward.1} parent=1 // pred_check_branch
      %39 = sbr.rel (0) target = $region13
    $region12: #{feed_forward.1} parent=1 // pred_region
      %s41 = ssub.s32 16, 16
      %42 = vsyncadd [#allocation6], %s41
      %s44 = sshll.u32 [#allocation7], 4
      %s45 = int_to_ptr.vmem [resolvable:$true] %s44
      %47 = dma.hbm_to_vmem [thread:$0]  %s2, 16, %s45, [#allocation6]
    $region13: #{feed_forward.1} parent=1 // pred_fallthru
      _
    // Predicated region
    $region14: #{feed_forward.1} parent=1 // pred_check
      _
    $region15: #{feed_forward.1} parent=1 // pred_check_branch
      %49 = sbr.rel (0) target = $region17
    $region16: #{feed_forward.1} parent=1 // pred_region
      %s51 = ssub.s32 1024, 1024
      %52 = vsyncadd [#allocation9], %s51
      %s53 = sshll.u32 [#allocation8], 4
      %s54 = int_to_ptr.vmem [resolvable:$true] %s53
      %59 = dma.hbm_to_vmem [thread:$0]  %s3, 1024, %s54, [#allocation9], 128, 128, 8
    $region17: #{feed_forward.1} parent=1 // pred_fallthru
      _
    // Predicated region
    $region18: #{feed_forward.1} parent=1 // pred_check
      _
    $region19: #{feed_forward.1} parent=1 // pred_check_branch
      %61 = sbr.rel (0) target = $region21
    $region20: #{feed_forward.1} parent=1 // pred_region
      %s63 = ssub.s32 16, 16
      %64 = vsyncadd [#allocation9], %s63
      %s66 = sshll.u32 [#allocation10], 4
      %s67 = int_to_ptr.vmem [resolvable:$true] %s66
      %69 = dma.hbm_to_vmem [thread:$0]  %s4, 16, %s67, [#allocation9]
    $region21: #{feed_forward.1} parent=1 // pred_fallthru
      _
    // Predicated region
    $region22: #{feed_forward.1} parent=1 // pred_check
      _
    $region23: #{feed_forward.1} parent=1 // pred_check_branch
      %71 = sbr.rel (0) target = $region25
    $region24: #{feed_forward.1} parent=1 // pred_region
      %72 = dma.done [#allocation3], 256
    $region25: #{feed_forward.1} parent=1 // pred_fallthru
      _
    // Predicated region
    $region26: #{feed_forward.1} parent=1 // pred_check
      _
    $region27: #{feed_forward.1} parent=1 // pred_check_branch
      %74 = sbr.rel (0) target = $region29
    $region28: #{feed_forward.1} parent=1 // pred_region
      %75 = dma.done [#allocation6], 512
    $region29: #{feed_forward.1} parent=1 // pred_fallthru
      _
    // Predicated region
    $region30: #{feed_forward.1} parent=1 // pred_check
      _
    $region31: #{feed_forward.1} parent=1 // pred_check_branch
      %77 = sbr.rel (0) target = $region33
    $region32: #{feed_forward.1} parent=1 // pred_region
      %78 = dma.done [#allocation6], 16
    $region33: #{feed_forward.1} parent=1 // pred_fallthru
      _
    // Predicated region
    $region34: #{feed_forward.1} parent=1 // pred_check
      _
    $region35: #{feed_forward.1} parent=1 // pred_check_branch
      %80 = sbr.rel (0) target = $region37
    $region36: #{feed_forward.1} parent=1 // pred_region
      %81 = dma.done [#allocation9], 1024
    $region37: #{feed_forward.1} parent=1 // pred_fallthru
      _
    // Predicated region
    $region38: #{feed_forward.1} parent=1 // pred_check
      _
    $region39: #{feed_forward.1} parent=1 // pred_check_branch
      %83 = sbr.rel (0) target = $region41
    $region40: #{feed_forward.1} parent=1 // pred_region
      %84 = dma.done [#allocation9], 16
    $region41: #{feed_forward.1} parent=1 // pred_fallthru
      _
    %v85 = vld [vmem:[#allocation2] sm:$0xff]
    %v86 = vld [vmem:[#allocation2 + $0x8] sm:$0xff]
    %v87 = vld [vmem:[#allocation5] sm:$0xff]
    %v88 = vld [vmem:[#allocation5 + $0x8] sm:$0xff]
    %v89 = vld [vmem:[#allocation5 + $0x10] sm:$0xff]
    %v90 = vld [vmem:[#allocation5 + $0x18] sm:$0xff]
    %v91 = vld [vmem:[#allocation7] sm:$0x1]
    %v93 = vlaneseq
    %v94 = vshrl.u32 %v93, 7
    %v95 = vsub.s32 0, %v94
    %v96 = vrot.slane %v91, %v95
    %vm98 = vcmask 261120
    %v100 = vsel %vm98, %v85, 0
    %v103 = vsel %vm98, %v86, 0
    %105 = vmatprep.subr.mxu0 0.0
    %106 = vmatpush1.msra.mxu0 %v87
    %107 = vmatprep.subr.mxu0 0.0
    %108 = vmatpush1.msra.mxu0 %v88
    %109 = vmatprep.subr.mxu0 0.0
    %110 = vmatpush1.msra.mxu0 %v89
    %111 = vmatprep.subr.mxu0 0.0
    %112 = vmatpush1.msra.mxu0 %v90
    %113 = vmatprep.subr.mxu0 0.0
    %114 = vmatpush1.msra.mxu0 0.0
    %115 = vmatprep.subr.mxu0 0.0
    %116 = vmatpush1.msra.mxu0 0.0
    %117 = vmatprep.subr.mxu0 0.0
    %118 = vmatpush1.msra.mxu0 0.0
    %119 = vmatprep.subr.mxu0 0.0
    %120 = vmatpush1.msra.mxu0 0.0
    %121 = vmatprep.subr.mxu0 0.0
    %122 = vmatpush1.msra.mxu0 0.0
    %123 = vmatprep.subr.mxu0 0.0
    %124 = vmatpush1.msra.mxu0 0.0
    %125 = vmatprep.subr.mxu0 0.0
    %126 = vmatpush1.msra.mxu0 0.0
    %127 = vmatprep.subr.mxu0 0.0
    %128 = vmatpush1.msra.mxu0 0.0
    %129 = vmatprep.subr.mxu0 0.0
    %130 = vmatpush1.msra.mxu0 0.0
    %131 = vmatprep.subr.mxu0 0.0
    %132 = vmatpush1.msra.mxu0 0.0
    %133 = vmatprep.subr.mxu0 0.0
    %134 = vmatpush1.msra.mxu0 0.0
    %135 = vmatprep.subr.mxu0 0.0
    %136 = vmatpush1.msra.mxu0 0.0
    %137 = vmatprep.subr.mxu0 0.0
    %138 = vmatpush1.msra.mxu0 0.0
    %139 = vmatprep.subr.mxu0 0.0
    %140 = vmatpush1.msra.mxu0 0.0
    %141 = vmatprep.subr.mxu0 0.0
    %142 = vmatpush1.msra.mxu0 0.0
    %143 = vmatprep.subr.mxu0 0.0
    %144 = vmatpush1.msra.mxu0 0.0
    %145 = vmatprep.subr.mxu0 0.0
    %146 = vmatpush1.msra.mxu0 0.0
    %147 = vmatprep.subr.mxu0 0.0
    %148 = vmatpush1.msra.mxu0 0.0
    %149 = vmatprep.subr.mxu0 0.0
    %150 = vmatpush1.msra.mxu0 0.0
    %151 = vmatprep.subr.mxu0 0.0
    %152 = vmatpush1.msra.mxu0 0.0
    %153 = vmatprep.subr.mxu0 0.0
    %154 = vmatpush1.msra.mxu0 0.0
    %155 = vmatprep.subr.mxu0 0.0
    %156 = vmatpush1.msra.mxu0 0.0
    %157 = vmatprep.subr.mxu0 0.0
    %158 = vmatpush1.msra.mxu0 0.0
    %159 = vmatprep.subr.mxu0 0.0
    %160 = vmatpush1.msra.mxu0 0.0
    %161 = vmatprep.subr.mxu0 0.0
    %162 = vmatpush1.msra.mxu0 0.0
    %163 = vmatprep.subr.mxu0 0.0
    %164 = vmatpush1.msra.mxu0 0.0
    %165 = vmatprep.subr.mxu0 0.0
    %166 = vmatpush1.msra.mxu0 0.0
    %167 = vmatprep.subr.mxu0 0.0
    %168 = vmatpush1.msra.mxu0 0.0
    %169 = vmatprep.mubr.f32.mxu0 0.0
    %170 = vmatmul.mubr.f32.gmra.mrb[0].mxu0 %v100
    %v171 = vpop.f32.mrb[0].mxu0
    %v172 = vadd.f32 %v96, %v171
    %v173 = vpop.f32.mrb[0].mxu0
    %174 = vmatprep.mubr.f32.mxu0 0.0
    %175 = vmatmul.mubr.f32.gmra.mrb[0].mxu0 %v103
    %v176 = vpop.f32.mrb[0].mxu0
    %v177 = vadd.f32 %v96, %v176
    %v178 = vpop.f32.mrb[0].mxu0
    %179 = vdwg.mxu0
    %v180 = vmul.f32 %v172, 0.5
    %v181 = vmul.f32 %v177, 0.5
    %v182 = vmul.f32 %v172, 0.70710677
    %v183 = vmul.f32 %v177, 0.70710677
    %v184 = verf.f32.pop %v182
    %v185 = verf.f32.pop %v183
    %v186 = vadd.f32 %v184, 1.0
    %v187 = vadd.f32 %v185, 1.0
    %v188 = vmul.f32 %v180, %v186
    %v189 = vmul.f32 %v181, %v187
    %v190 = vld [vmem:[#allocation8] sm:$0xff]
    %v191 = vld [vmem:[#allocation8 + $0x8] sm:$0xff]
    %v192 = vld [vmem:[#allocation8 + $0x10] sm:$0xff]
    %v193 = vld [vmem:[#allocation8 + $0x18] sm:$0xff]
    %v194 = vld [vmem:[#allocation8 + $0x20] sm:$0xff]
    %v195 = vld [vmem:[#allocation8 + $0x28] sm:$0xff]
    %v196 = vld [vmem:[#allocation8 + $0x30] sm:$0xff]
    %v197 = vld [vmem:[#allocation8 + $0x38] sm:$0xff]
    %v198 = vld [vmem:[#allocation10] sm:$0x1]
    %v200 = vlaneseq
    %v201 = vshrl.u32 %v200, 7
    %v202 = vsub.s32 0, %v201
    %v203 = vrot.slane %v198, %v202
    %vm205 = vcmask 523264
    %v207 = vsel %vm205, %v188, 0
    %v210 = vsel %vm205, %v189, 0
    %212 = vmatprep.subr.mxu0 0.0
    %213 = vmatpush1.msra.mxu0 %v190
    %214 = vmatprep.subr.mxu0 0.0
    %215 = vmatpush1.msra.mxu0 %v191
    %216 = vmatprep.subr.mxu0 0.0
    %217 = vmatpush1.msra.mxu0 %v192
    %218 = vmatprep.subr.mxu0 0.0
    %219 = vmatpush1.msra.mxu0 %v193
    %220 = vmatprep.subr.mxu0 0.0
    %221 = vmatpush1.msra.mxu0 %v194
    %222 = vmatprep.subr.mxu0 0.0
    %223 = vmatpush1.msra.mxu0 %v195
    %224 = vmatprep.subr.mxu0 0.0
    %225 = vmatpush1.msra.mxu0 %v196
    %226 = vmatprep.subr.mxu0 0.0
    %227 = vmatpush1.msra.mxu0 %v197
    %228 = vmatprep.subr.mxu0 0.0
    %229 = vmatpush1.msra.mxu0 0.0
    %230 = vmatprep.subr.mxu0 0.0
    %231 = vmatpush1.msra.mxu0 0.0
    %232 = vmatprep.subr.mxu0 0.0
    %233 = vmatpush1.msra.mxu0 0.0
    %234 = vmatprep.subr.mxu0 0.0
    %235 = vmatpush1.msra.mxu0 0.0
    %236 = vmatprep.subr.mxu0 0.0
    %237 = vmatpush1.msra.mxu0 0.0
    %238 = vmatprep.subr.mxu0 0.0
    %239 = vmatpush1.msra.mxu0 0.0
    %240 = vmatprep.subr.mxu0 0.0
    %241 = vmatpush1.msra.mxu0 0.0
    %242 = vmatprep.subr.mxu0 0.0
    %243 = vmatpush1.msra.mxu0 0.0
    %244 = vmatprep.subr.mxu0 0.0
    %245 = vmatpush1.msra.mxu0 0.0
    %246 = vmatprep.subr.mxu0 0.0
    %247 = vmatpush1.msra.mxu0 0.0
    %248 = vmatprep.subr.mxu0 0.0
    %249 = vmatpush1.msra.mxu0 0.0
    %250 = vmatprep.subr.mxu0 0.0
    %251 = vmatpush1.msra.mxu0 0.0
    %252 = vmatprep.subr.mxu0 0.0
    %253 = vmatpush1.msra.mxu0 0.0
    %254 = vmatprep.subr.mxu0 0.0
    %255 = vmatpush1.msra.mxu0 0.0
    %256 = vmatprep.subr.mxu0 0.0
    %257 = vmatpush1.msra.mxu0 0.0
    %258 = vmatprep.subr.mxu0 0.0
    %259 = vmatpush1.msra.mxu0 0.0
    %260 = vmatprep.subr.mxu0 0.0
    %261 = vmatpush1.msra.mxu0 0.0
    %262 = vmatprep.subr.mxu0 0.0
    %263 = vmatpush1.msra.mxu0 0.0
    %264 = vmatprep.subr.mxu0 0.0
    %265 = vmatpush1.msra.mxu0 0.0
    %266 = vmatprep.subr.mxu0 0.0
    %267 = vmatpush1.msra.mxu0 0.0
    %268 = vmatprep.subr.mxu0 0.0
    %269 = vmatpush1.msra.mxu0 0.0
    %270 = vmatprep.subr.mxu0 0.0
    %271 = vmatpush1.msra.mxu0 0.0
    %272 = vmatprep.subr.mxu0 0.0
    %273 = vmatpush1.msra.mxu0 0.0
    %274 = vmatprep.subr.mxu0 0.0
    %275 = vmatpush1.msra.mxu0 0.0
    %276 = vmatprep.mubr.f32.mxu0 0.0
    %277 = vmatmul.mubr.f32.gmra.mrb[0].mxu0 %v207
    %v278 = vpop.f32.mrb[0].mxu0
    %v279 = vadd.f32 %v203, %v278
    %v280 = vpop.f32.mrb[0].mxu0
    %281 = vmatprep.mubr.f32.mxu0 0.0
    %282 = vmatmul.mubr.f32.gmra.mrb[0].mxu0 %v210
    %v283 = vpop.f32.mrb[0].mxu0
    %v284 = vadd.f32 %v203, %v283
    %v285 = vpop.f32.mrb[0].mxu0
    %286 = vdwg.mxu0
    %287 = vst.msk [vmem:[#allocation11] sm:$0xff] %vm98, %v279
    %288 = vst.msk [vmem:[#allocation11 + $0x8] sm:$0xff] %vm98, %v284
    // Predicated region
    $region42: #{feed_forward.1} parent=1 // pred_check
      _
    $region43: #{feed_forward.1} parent=1 // pred_check_branch
      %290 = sbr.rel (0) target = $region45
    $region44: #{feed_forward.1} parent=1 // pred_region
      %s292 = ssub.s32 256, 256
      %293 = vsyncadd [#allocation4], %s292
      %s294 = sshll.u32 [#allocation11], 4
      %s295 = int_to_ptr.vmem [resolvable:$true] %s294
      %300 = dma.vmem_to_hbm [thread:$0]  %s295, 256, %s5, [#allocation4], 128, 128, 8
    $region45: #{feed_forward.1} parent=1 // pred_fallthru
      _
    // Predicated region
    $region46: #{feed_forward.1} parent=1 // pred_check
      _
    $region47: #{feed_forward.1} parent=1 // pred_check_branch
      %302 = sbr.rel (0) target = $region49
    $region48: #{feed_forward.1} parent=1 // pred_region
      %303 = dma.done [#allocation4], 256
    $region49: #{feed_forward.1} parent=1 // pred_fallthru
      _
    %304 = vsyncpa [#allocation3], 1
    %305 = vsyncpa [#allocation6], 1
    %306 = vsyncpa [#allocation9], 1
    %307 = vsyncpa [#allocation4], 1

</llo_original>
